<compile_context>
chip_gen: v7x
topology: tpu7x:2x2x1
jax: 0.10.0
libtpu: 0.0.40
codegen_flags: <defaults>
</compile_context>

<pallas_src>
import functools

import jax
import jax.numpy as jnp
from jax import lax
from jax.experimental import pallas as pl
from jax.experimental.pallas import tpu as pltpu


def _squash(x, axis, eps):
    # sq/(1+sq)/sqrt(eps+sq) fused into a single divide (numerically equivalent).
    sq = jnp.sum(x * x, axis=axis, keepdims=True)
    scale = sq / ((1.0 + sq) * jnp.sqrt(eps + sq))
    return scale * x


def _softmax(b, axis):
    m = jnp.max(b, axis=axis, keepdims=True)
    e = jnp.exp(b - m)
    return e / jnp.sum(e, axis=axis, keepdims=True)


def _routing_kernel(x_ref, w_ref, b_ref, out_ref, *, iterations, eps, out_dim,
                    matmul_dtype, flatten_km, mxu_routing):
    # x_ref: (bC, K, D)  w_ref: (D, Dp)  b_ref: (1, Dp)  out_ref: (bC, D)
    bC, K, D_in = x_ref.shape
    Dp = w_ref.shape[1]

    x = x_ref[...].astype(matmul_dtype)
    w = w_ref[...]                      # already staged in matmul_dtype by the wrapper
    bias = b_ref[...]                   # (1, Dp) f32

    # Linear layer on the MXU with f32 accumulation. Padded output lanes of W/bias are
    # zero, so every downstream intermediate has exactly-zero padded lanes.
    if flatten_km:
        # K % 8 == 0: collapsing (bC, K) is a free sublane relayout -> one 2-D matmul.
        e = jnp.dot(x.reshape(bC * K, D_in), w, preferred_element_type=jnp.float32)
        e = (e + bias).reshape(bC, K, Dp)
    else:
        # ragged K: batched 3-D contraction avoids materializing reshape copies.
        e = lax.dot_general(x, w, dimension_numbers=(((2,), (0,)), ((), ())),
                            preferred_element_type=jnp.float32)
        e = e + bias
    e_hat = _squash(e, axis=2, eps=eps)                       # (bC, K, Dp)

    b = jnp.zeros((bC, K), jnp.float32)
    c_i = jnp.zeros((bC, Dp), jnp.float32)

    def routing_step(b, _):
        di = _softmax(b, axis=1)                              # (bC, K)
        if mxu_routing:
            # 'ckd,ck->cd' on the MXU (frees the XLU lane-reduce slot for large K*Dp).
            c_hat = lax.dot_general(e_hat, di, (((1,), (1,)), ((0,), (0,))),
                                    preferred_element_type=jnp.float32)
        else:
            c_hat = jnp.sum(e_hat * di[:, :, None], axis=1)   # (bC, Dp)
        c_new = _squash(c_hat, axis=1, eps=eps)
        if mxu_routing:
            # 'ckd,cd->ck'
            delta = lax.dot_general(e_hat, c_new, (((2,), (1,)), ((0,), (0,))),
                                    preferred_element_type=jnp.float32)
        else:
            delta = jnp.sum(e_hat * c_new[:, None, :], axis=2)  # (bC, K)
        return b + delta, c_new

    if iterations > 8:
        # bound live ranges / compile time for long routing schedules
        b, c_i = lax.fori_loop(0, iterations,
                               lambda t, carry: routing_step(*carry), (b, c_i))
    else:
        for _ in range(iterations):
            b, c_i = routing_step(b, c_i)

    if out_dim == Dp:
        out_ref[...] = c_i.astype(out_ref.dtype)
    else:
        out_ref[...] = c_i[:, :out_dim].astype(out_ref.dtype)


_VMEM_BUDGET = 36 * 1024 * 1024   # per-step live bytes; headroom under v7x's 64 MiB / TC


def _choose_block_c(Cp, K, D, Dp, x_itemsize, w_itemsize):
    w_bytes = (D * Dp) * w_itemsize + Dp * 4                 # single-buffered W + bias

    def footprint(bc):
        return (2 * bc * K * D * x_itemsize                  # double-buffered x tile
                + 3 * bc * K * Dp * 4                        # e, e_hat, broadcast temp (f32)
                + 2 * bc * Dp * 4                            # c_i / output tile
                + w_bytes)

    cands = [c for c in range(8, Cp + 1, 8) if Cp % c == 0] or [Cp]
    fitting = [c for c in cands if footprint(c) <= _VMEM_BUDGET] or [cands[0]]
    # Smallest block whose matmul M-dim (block_C*K) fills a 256-wide MXU; else biggest fitting.
    filled = [c for c in fitting if c * K >= 256]
    bc = filled[0] if filled else fitting[-1]
    # Keep >=2 grid steps so v7x's second TensorCore gets work, unless it starves the MXU.
    if Cp // bc < 2:
        alt = [c for c in fitting if Cp // c >= 2]
        if alt and (alt[-1] * K >= 128 or not filled):
            bc = alt[-1]
    return bc, footprint(bc)


def _resident_spec(shape):
    idx = lambda i: tuple(0 for _ in shape)
    try:
        # Constant index_map + single pipeline buffer: weight/bias stay resident in VMEM
        # without the default 2x double-buffer footprint.
        return pl.BlockSpec(shape, idx, pipeline_mode=pl.Buffered(1))
    except TypeError:
        # Older jax without pipeline_mode: fall back to default buffering.
        return pl.BlockSpec(shape, idx)


def dynamic_routing(support_feature, W_t, bias, iterations, eps=1e-9, matmul_dtype=None):
    """support_feature: (C, K, D); W_t: (D, D) pre-transposed nn.Linear weight; bias: (D,)."""
    if iterations < 1:
        raise ValueError("iterations must be >= 1 (the module returns the last c_i)")
    C, K, D = support_feature.shape

    # bf16 MXU inputs (f32 accumulation) once the linear layer is big enough to matter;
    # small D stays f32 so the kernel matches the f32 reference to tight tolerance.
    if matmul_dtype is None:
        matmul_dtype = jnp.bfloat16 if D >= 512 else jnp.float32

    # Lane-dense feature dim for everything downstream of the linear: pad only W's OUTPUT
    # dim (and bias) to a multiple of 128. Activations stay unpadded in HBM; padded lanes
    # of e/e_hat/c_i are exactly zero, so squash/softmax/routing are unchanged and the
    # output is written directly at width D.
    Dp = max(128, pl.cdiv(D, 128) * 128)
    pad_d = Dp - D

    x = support_feature.astype(matmul_dtype)      # only the matmul consumes x
    w = W_t.astype(matmul_dtype)
    bv = bias.astype(jnp.float32)
    if pad_d:
        w = jnp.pad(w, ((0, 0), (0, pad_d)))
        bv = jnp.pad(bv, ((0, pad_d),))
    b2 = bv.reshape(1, Dp)

    # Pad classes to a multiple of 8 (sublane tile). Padded classes are independent and
    # sliced off, so this is exact; it keeps pipelining / megacore sharding for any C.
    Cp = ((C + 7) // 8) * 8
    if Cp != C:
        x = jnp.pad(x, ((0, Cp - C), (0, 0), (0, 0)))

    itemsize = jnp.dtype(matmul_dtype).itemsize
    block_C, live_bytes = _choose_block_c(Cp, K, D, Dp, itemsize, itemsize)
    grid = (Cp // block_C,)

    flatten_km = (K % 8 == 0)                 # collapse (bC, K) only when it is a free relayout
    mxu_routing = (K >= 64 and Dp >= 256)     # MXU offload of the routing contractions

    # Raise the scoped-VMEM limit above the computed footprint; cap below v7x's 64 MiB.
    vmem_limit = int(min(56 * 2**20, max(32 * 2**20, int(1.5 * live_bytes))))
    # TODO(synk): shapes whose minimal (block_C=8) footprint exceeds ~56 MiB need a K-split.

    kernel = functools.partial(
        _routing_kernel, iterations=iterations, eps=eps, out_dim=D,
        matmul_dtype=matmul_dtype, flatten_km=flatten_km, mxu_routing=mxu_routing)

    out = pl.pallas_call(
        kernel,
        out_shape=jax.ShapeDtypeStruct((Cp, D), jnp.float32),
        grid_spec=pltpu.PrefetchScalarGridSpec(
            num_scalar_prefetch=0,
            grid=grid,
            in_specs=[
                pl.BlockSpec((block_C, K, D), lambda i: (i, 0, 0)),
                _resident_spec((D, Dp)),      # weight: resident, single-buffered
                _resident_spec((1, Dp)),      # bias
            ],
            out_specs=pl.BlockSpec((block_C, D), lambda i: (i, 0)),
        ),
        compiler_params=pltpu.CompilerParams(
            dimension_semantics=("parallel",),
            vmem_limit_bytes=vmem_limit),
    )(x, w, b2)
    return out[:C] if Cp != C else out


def dynamic_routing_ref(support_feature, W_t, bias, iterations, eps=1e-9):
    """Pure-JAX reference mirroring the PyTorch forward (f32, HIGHEST-precision matmul)."""
    C, K, D = support_feature.shape
    e = jnp.dot(support_feature.reshape(-1, D), W_t,
                precision=lax.Precision.HIGHEST) + bias
    e_hat = _squash(e.reshape(C, K, D), axis=2, eps=eps)
    b = jnp.zeros((C, K), jnp.float32)
    c_i = None
    for _ in range(iterations):
        di = _softmax(b, axis=1)[:, :, None]
        c_hat = jnp.sum(e_hat * di, axis=1)
        c_i = _squash(c_hat, axis=1, eps=eps)
        b = b + jnp.sum(e_hat * c_i[:, None, :], axis=2)
    return c_i


if __name__ == "__main__":
    # Small deterministic setup: C classes, K shots, feature_dim D.
    C, K, D = 4, 8, 32
    iterations = 3

    key = jax.random.PRNGKey(0)
    k1, k2, k3 = jax.random.split(key, 3)

    support_feature = jax.random.normal(k1, (C, K, D), dtype=jnp.float32)
    # nn.Linear(D, D) params; weight stored pre-transposed as (D_in, D_out).
    W_t = jax.random.normal(k2, (D, D), dtype=jnp.float32) * (1.0 / jnp.sqrt(D))
    bias = jax.random.normal(k3, (D,), dtype=jnp.float32) * 0.01

    out = dynamic_routing(support_feature, W_t, bias, iterations)
    out = jax.block_until_ready(out)
    assert out.shape == (C, D)

    ref = dynamic_routing_ref(support_feature, W_t, bias, iterations)
    # Small-D path runs the MXU in f32 (bf16 only kicks in at D>=512, which needs ~1e-2 tol).
    assert jnp.allclose(out, ref, atol=1e-4, rtol=1e-4), "Pallas output mismatch vs reference"

    print("KERNEL_OK")
</pallas_src>

<mosaic_0001>
module attributes {stable_mosaic.version = 11 : i64} {
  func.func @_routing_kernel(%arg0: i32, %arg1: memref<8x8x32xf32, #tpu.memory_space<vmem>>, %arg2: memref<32x128xf32, #tpu.memory_space<vmem>>, %arg3: memref<1x128xf32, #tpu.memory_space<vmem>>, %arg4: memref<8x32xf32, #tpu.memory_space<vmem>>) attributes {dimension_semantics = [#tpu.dimension_semantics<parallel>], iteration_bounds = array<i64: 1>, scalar_prefetch = 0 : i64, scratch_operands = 0 : i64, tpu.core_type = #tpu.core_type<tc>, window_params = [{transform_indices = @transform_0, window_bounds = array<i64: 8, 8, 32>}, {pipeline_mode = #tpu.pipeline_mode<synchronous>, transform_indices = @transform_1, window_bounds = array<i64: 32, 128>}, {pipeline_mode = #tpu.pipeline_mode<synchronous>, transform_indices = @transform_2, window_bounds = array<i64: 1, 128>}, {transform_indices = @transform_3, window_bounds = array<i64: 8, 32>}]} {
    %c0 = arith.constant 0 : index
    %c0_0 = arith.constant 0 : index
    %c0_1 = arith.constant 0 : index
    %0 = vector.load %arg1[%c0, %c0_0, %c0_1] : memref<8x8x32xf32, #tpu.memory_space<vmem>>, vector<8x8x32xf32>
    %c0_2 = arith.constant 0 : index
    %c0_3 = arith.constant 0 : index
    %1 = vector.load %arg2[%c0_2, %c0_3] : memref<32x128xf32, #tpu.memory_space<vmem>>, vector<32x128xf32>
    %c0_4 = arith.constant 0 : index
    %c0_5 = arith.constant 0 : index
    %2 = vector.load %arg3[%c0_4, %c0_5] : memref<1x128xf32, #tpu.memory_space<vmem>>, vector<1x128xf32>
    %3 = vector.shape_cast %0 : vector<8x8x32xf32> to vector<64x32xf32>
    %cst = arith.constant dense<0.000000e+00> : vector<64x128xf32>
    %4 = tpu.matmul %3, %1, %cst {dimension_numbers = #tpu.dot_dimension_numbers<[1], [0], [0], [1], [0, 0, 1, 1], [], []>} : vector<64x32xf32>, vector<32x128xf32>, vector<64x128xf32> -> vector<64x128xf32>
    %5 = vector.broadcast %2 : vector<1x128xf32> to vector<64x128xf32>
    %6 = arith.addf %4, %5 : vector<64x128xf32>
    %7 = vector.shape_cast %6 : vector<64x128xf32> to vector<8x8x128xf32>
    %8 = arith.mulf %7, %7 : vector<8x8x128xf32>
    %cst_6 = arith.constant dense<0.000000e+00> : vector<8x8xf32>
    %9 = vector.multi_reduction <add>, %8, %cst_6 [2] : vector<8x8x128xf32> to vector<8x8xf32>
    %10 = vector.shape_cast %9 : vector<8x8xf32> to vector<8x8x1xf32>
    %cst_7 = arith.constant 1.000000e+00 : f32
    %11 = vector.broadcast %cst_7 : f32 to vector<8x8x1xf32>
    %12 = arith.addf %11, %10 : vector<8x8x1xf32>
    %cst_8 = arith.constant 9.99999971E-10 : f32
    %13 = vector.broadcast %cst_8 : f32 to vector<8x8x1xf32>
    %14 = arith.addf %13, %10 : vector<8x8x1xf32>
    %15 = math.sqrt %14 : vector<8x8x1xf32>
    %16 = arith.mulf %12, %15 : vector<8x8x1xf32>
    %17 = arith.divf %10, %16 : vector<8x8x1xf32>
    %18 = vector.broadcast %17 : vector<8x8x1xf32> to vector<8x8x128xf32>
    %19 = arith.mulf %18, %7 : vector<8x8x128xf32>
    %cst_9 = arith.constant 0.000000e+00 : f32
    %20 = vector.broadcast %cst_9 : f32 to vector<8x8xf32>
    %cst_10 = arith.constant dense<0xFF800000> : vector<8xf32>
    %21 = vector.multi_reduction <maximumf>, %20, %cst_10 [1] : vector<8x8xf32> to vector<8xf32>
    %22 = vector.shape_cast %21 : vector<8xf32> to vector<8x1xf32>
    %23 = vector.broadcast %22 : vector<8x1xf32> to vector<8x8xf32>
    %24 = arith.subf %20, %23 : vector<8x8xf32>
    %25 = math.exp %24 : vector<8x8xf32>
    %cst_11 = arith.constant dense<0.000000e+00> : vector<8xf32>
    %26 = vector.multi_reduction <add>, %25, %cst_11 [1] : vector<8x8xf32> to vector<8xf32>
    %27 = vector.shape_cast %26 : vector<8xf32> to vector<8x1xf32>
    %28 = vector.broadcast %27 : vector<8x1xf32> to vector<8x8xf32>
    %29 = arith.divf %25, %28 : vector<8x8xf32>
    %30 = vector.shape_cast %29 : vector<8x8xf32> to vector<8x8x1xf32>
    %31 = vector.broadcast %30 : vector<8x8x1xf32> to vector<8x8x128xf32>
    %32 = arith.mulf %19, %31 : vector<8x8x128xf32>
    %cst_12 = arith.constant dense<0.000000e+00> : vector<8x128xf32>
    %33 = vector.multi_reduction <add>, %32, %cst_12 [1] : vector<8x8x128xf32> to vector<8x128xf32>
    %34 = arith.mulf %33, %33 : vector<8x128xf32>
    %cst_13 = arith.constant dense<0.000000e+00> : vector<8xf32>
    %35 = vector.multi_reduction <add>, %34, %cst_13 [1] : vector<8x128xf32> to vector<8xf32>
    %36 = vector.shape_cast %35 : vector<8xf32> to vector<8x1xf32>
    %cst_14 = arith.constant 1.000000e+00 : f32
    %37 = vector.broadcast %cst_14 : f32 to vector<8x1xf32>
    %38 = arith.addf %37, %36 : vector<8x1xf32>
    %cst_15 = arith.constant 9.99999971E-10 : f32
    %39 = vector.broadcast %cst_15 : f32 to vector<8x1xf32>
    %40 = arith.addf %39, %36 : vector<8x1xf32>
    %41 = math.sqrt %40 : vector<8x1xf32>
    %42 = arith.mulf %38, %41 : vector<8x1xf32>
    %43 = arith.divf %36, %42 : vector<8x1xf32>
    %44 = vector.broadcast %43 : vector<8x1xf32> to vector<8x128xf32>
    %45 = arith.mulf %44, %33 : vector<8x128xf32>
    %46 = vector.shape_cast %45 : vector<8x128xf32> to vector<8x1x128xf32>
    %47 = vector.broadcast %46 : vector<8x1x128xf32> to vector<8x8x128xf32>
    %48 = arith.mulf %19, %47 : vector<8x8x128xf32>
    %cst_16 = arith.constant dense<0.000000e+00> : vector<8x8xf32>
    %49 = vector.multi_reduction <add>, %48, %cst_16 [2] : vector<8x8x128xf32> to vector<8x8xf32>
    %50 = arith.addf %20, %49 : vector<8x8xf32>
    %cst_17 = arith.constant dense<0xFF800000> : vector<8xf32>
    %51 = vector.multi_reduction <maximumf>, %50, %cst_17 [1] : vector<8x8xf32> to vector<8xf32>
    %52 = vector.shape_cast %51 : vector<8xf32> to vector<8x1xf32>
    %53 = vector.broadcast %52 : vector<8x1xf32> to vector<8x8xf32>
    %54 = arith.subf %50, %53 : vector<8x8xf32>
    %55 = math.exp %54 : vector<8x8xf32>
    %cst_18 = arith.constant dense<0.000000e+00> : vector<8xf32>
    %56 = vector.multi_reduction <add>, %55, %cst_18 [1] : vector<8x8xf32> to vector<8xf32>
    %57 = vector.shape_cast %56 : vector<8xf32> to vector<8x1xf32>
    %58 = vector.broadcast %57 : vector<8x1xf32> to vector<8x8xf32>
    %59 = arith.divf %55, %58 : vector<8x8xf32>
    %60 = vector.shape_cast %59 : vector<8x8xf32> to vector<8x8x1xf32>
    %61 = vector.broadcast %60 : vector<8x8x1xf32> to vector<8x8x128xf32>
    %62 = arith.mulf %19, %61 : vector<8x8x128xf32>
    %cst_19 = arith.constant dense<0.000000e+00> : vector<8x128xf32>
    %63 = vector.multi_reduction <add>, %62, %cst_19 [1] : vector<8x8x128xf32> to vector<8x128xf32>
    %64 = arith.mulf %63, %63 : vector<8x128xf32>
    %cst_20 = arith.constant dense<0.000000e+00> : vector<8xf32>
    %65 = vector.multi_reduction <add>, %64, %cst_20 [1] : vector<8x128xf32> to vector<8xf32>
    %66 = vector.shape_cast %65 : vector<8xf32> to vector<8x1xf32>
    %cst_21 = arith.constant 1.000000e+00 : f32
    %67 = vector.broadcast %cst_21 : f32 to vector<8x1xf32>
    %68 = arith.addf %67, %66 : vector<8x1xf32>
    %cst_22 = arith.constant 9.99999971E-10 : f32
    %69 = vector.broadcast %cst_22 : f32 to vector<8x1xf32>
    %70 = arith.addf %69, %66 : vector<8x1xf32>
    %71 = math.sqrt %70 : vector<8x1xf32>
    %72 = arith.mulf %68, %71 : vector<8x1xf32>
    %73 = arith.divf %66, %72 : vector<8x1xf32>
    %74 = vector.broadcast %73 : vector<8x1xf32> to vector<8x128xf32>
    %75 = arith.mulf %74, %63 : vector<8x128xf32>
    %76 = vector.shape_cast %75 : vector<8x128xf32> to vector<8x1x128xf32>
    %77 = vector.broadcast %76 : vector<8x1x128xf32> to vector<8x8x128xf32>
    %78 = arith.mulf %19, %77 : vector<8x8x128xf32>
    %cst_23 = arith.constant dense<0.000000e+00> : vector<8x8xf32>
    %79 = vector.multi_reduction <add>, %78, %cst_23 [2] : vector<8x8x128xf32> to vector<8x8xf32>
    %80 = arith.addf %50, %79 : vector<8x8xf32>
    %cst_24 = arith.constant dense<0xFF800000> : vector<8xf32>
    %81 = vector.multi_reduction <maximumf>, %80, %cst_24 [1] : vector<8x8xf32> to vector<8xf32>
    %82 = vector.shape_cast %81 : vector<8xf32> to vector<8x1xf32>
    %83 = vector.broadcast %82 : vector<8x1xf32> to vector<8x8xf32>
    %84 = arith.subf %80, %83 : vector<8x8xf32>
    %85 = math.exp %84 : vector<8x8xf32>
    %cst_25 = arith.constant dense<0.000000e+00> : vector<8xf32>
    %86 = vector.multi_reduction <add>, %85, %cst_25 [1] : vector<8x8xf32> to vector<8xf32>
    %87 = vector.shape_cast %86 : vector<8xf32> to vector<8x1xf32>
    %88 = vector.broadcast %87 : vector<8x1xf32> to vector<8x8xf32>
    %89 = arith.divf %85, %88 : vector<8x8xf32>
    %90 = vector.shape_cast %89 : vector<8x8xf32> to vector<8x8x1xf32>
    %91 = vector.broadcast %90 : vector<8x8x1xf32> to vector<8x8x128xf32>
    %92 = arith.mulf %19, %91 : vector<8x8x128xf32>
    %cst_26 = arith.constant dense<0.000000e+00> : vector<8x128xf32>
    %93 = vector.multi_reduction <add>, %92, %cst_26 [1] : vector<8x8x128xf32> to vector<8x128xf32>
    %94 = arith.mulf %93, %93 : vector<8x128xf32>
    %cst_27 = arith.constant dense<0.000000e+00> : vector<8xf32>
    %95 = vector.multi_reduction <add>, %94, %cst_27 [1] : vector<8x128xf32> to vector<8xf32>
    %96 = vector.shape_cast %95 : vector<8xf32> to vector<8x1xf32>
    %cst_28 = arith.constant 1.000000e+00 : f32
    %97 = vector.broadcast %cst_28 : f32 to vector<8x1xf32>
    %98 = arith.addf %97, %96 : vector<8x1xf32>
    %cst_29 = arith.constant 9.99999971E-10 : f32
    %99 = vector.broadcast %cst_29 : f32 to vector<8x1xf32>
    %100 = arith.addf %99, %96 : vector<8x1xf32>
    %101 = math.sqrt %100 : vector<8x1xf32>
    %102 = arith.mulf %98, %101 : vector<8x1xf32>
    %103 = arith.divf %96, %102 : vector<8x1xf32>
    %104 = vector.broadcast %103 : vector<8x1xf32> to vector<8x128xf32>
    %105 = arith.mulf %104, %93 : vector<8x128xf32>
    %106 = vector.extract_strided_slice %105 {offsets = [0, 0], sizes = [8, 32], strides = [1, 1]} : vector<8x128xf32> to vector<8x32xf32>
    %c0_30 = arith.constant 0 : index
    %c0_31 = arith.constant 0 : index
    %107 = vector.load %arg4[%c0_30, %c0_31] : memref<8x32xf32, #tpu.memory_space<vmem>>, vector<8x32xf32>
    tpu.vector_store %arg4[%c0_30, %c0_31], %106 {strides = array<i32>} : memref<8x32xf32, #tpu.memory_space<vmem>>, vector<8x32xf32>,
    return
  }
  func.func @transform_0(%arg0: i32) -> (i32, i32, i32) {
    %c0_i32 = arith.constant 0 : i32
    %c0_i32_0 = arith.constant 0 : i32
    %c0_i32_1 = arith.constant 0 : i32
    return %arg0, %c0_i32, %c0_i32_0 : i32, i32, i32
  }
  func.func @transform_1(%arg0: i32) -> (i32, i32) {
    %c0_i32 = arith.constant 0 : i32
    %c0_i32_0 = arith.constant 0 : i32
    %c0_i32_1 = arith.constant 0 : i32
    return %c0_i32, %c0_i32_0 : i32, i32
  }
  func.func @transform_2(%arg0: i32) -> (i32, i32) {
    %c0_i32 = arith.constant 0 : i32
    %c0_i32_0 = arith.constant 0 : i32
    %c0_i32_1 = arith.constant 0 : i32
    return %c0_i32, %c0_i32_0 : i32, i32
  }
  func.func @transform_3(%arg0: i32) -> (i32, i32) {
    %c0_i32 = arith.constant 0 : i32
    %c0_i32_0 = arith.constant 0 : i32
    return %arg0, %c0_i32 : i32, i32
  }
}

</mosaic_0001>

<llo_original>
// kernel: tpu_custom_call.1
$region0: #{tpu_custom_call.1}
  #allocation0 [shape = 'u32[]', space=smem, size = 0x4, offset = 0x4, fixed_abs, tag = 'smem constant byte address 0x4 - core index']
  #allocation1 [shape = 'u32[144,128]{1,0:T(1,128)}', space=vmem, size = 0x12000, scoped, tag = 'internal scratch']
  %s0 = inlined_call_operand.hbm [shape: f32[8,8,32], index: 0, kind: input, shape index: {}]
  %s1 = inlined_call_operand.hbm [shape: f32[32,128], index: 1, kind: input, shape index: {}]
  %s2 = inlined_call_operand.vmem [shape: f32[1,128], index: 2, kind: input, shape index: {}]
  %s3 = inlined_call_operand.hbm [shape: f32[8,32], index: 3, kind: output, shape index: {}]
  %s4 = sld [smem:[#allocation0]]
  $region30: #{tpu_custom_call.1} parent=0
    _
  %s6 = ssub.s32 1, %s4
  %s7 = scalar_select 0, %s6, %s4
  $region1: #{tpu_custom_call.1} parent=0
    #allocation2 [shape = 'u8[32768]{0}', space=vmem, size = 0x8000, scoped, tag = 'input window, operand 0, single buffered']
    #allocation3 [shape = 's32[1]{0}', space=sflag, size = 0x4, scoped, tag = 'scoped memory for tpu_custom_call.1']
    #allocation4 [shape = 's32[1]{0}', space=sflag, size = 0x4, scoped, tag = 'scoped memory for tpu_custom_call.1']
    #allocation5 [shape = 'u8[16384]{0}', space=vmem, size = 0x4000, scoped, tag = 'input window, operand 1, single buffered']
    #allocation6 [shape = 's32[1]{0}', space=sflag, size = 0x4, scoped, tag = 'scoped memory for tpu_custom_call.1']
    #allocation7 [shape = 'u8[4096]{0}', space=vmem, size = 0x1000, scoped, tag = 'output window, operand 0, single buffered']
    %8 = vsyncpa [#allocation3], 0
    %9 = vsyncpa [#allocation6], 0
    %10 = vsyncpa [#allocation4], 0
    // Predicated region
    $region2: #{tpu_custom_call.1} parent=1 // pred_check
      _
    $region3: #{tpu_custom_call.1} parent=1 // pred_check_branch
      %12 = sbr.rel (0) target = $region5
    $region4: #{tpu_custom_call.1} parent=1 // pred_region
      %s14 = ssub.s32 1024, 1024
      %15 = vsyncadd [#allocation3], %s14
      %s16 = sshll.u32 [#allocation2], 4
      %s17 = int_to_ptr.vmem [resolvable:$true] %s16
      %22 = dma.hbm_to_vmem [thread:$0]  %s0, 1024, %s17, [#allocation3], 128, 128, 8
    $region5: #{tpu_custom_call.1} parent=1 // pred_fallthru
      _
    // Predicated region
    $region6: #{tpu_custom_call.1} parent=1 // pred_check
      _
    $region7: #{tpu_custom_call.1} parent=1 // pred_check_branch
      %24 = sbr.rel (0) target = $region9
    $region8: #{tpu_custom_call.1} parent=1 // pred_region
      %s26 = ssub.s32 512, 512
      %27 = vsyncadd [#allocation6], %s26
      %s28 = sshll.u32 [#allocation5], 4
      %s29 = int_to_ptr.vmem [resolvable:$true] %s28
      %34 = dma.hbm_to_vmem [thread:$0]  %s1, 512, %s29, [#allocation6], 128, 128, 8
    $region9: #{tpu_custom_call.1} parent=1 // pred_fallthru
      _
    // Predicated region
    $region10: #{tpu_custom_call.1} parent=1 // pred_check
      _
    $region11: #{tpu_custom_call.1} parent=1 // pred_check_branch
      %36 = sbr.rel (0) target = $region13
    $region12: #{tpu_custom_call.1} parent=1 // pred_region
      _
    $region13: #{tpu_custom_call.1} parent=1 // pred_fallthru
      _
    // Predicated region
    $region14: #{tpu_custom_call.1} parent=1 // pred_check
      _
    $region15: #{tpu_custom_call.1} parent=1 // pred_check_branch
      %38 = sbr.rel (0) target = $region17
    $region16: #{tpu_custom_call.1} parent=1 // pred_region
      %39 = dma.done [#allocation3], 1024
    $region17: #{tpu_custom_call.1} parent=1 // pred_fallthru
      _
    // Predicated region
    $region18: #{tpu_custom_call.1} parent=1 // pred_check
      _
    $region19: #{tpu_custom_call.1} parent=1 // pred_check_branch
      %41 = sbr.rel (0) target = $region21
    $region20: #{tpu_custom_call.1} parent=1 // pred_region
      %42 = dma.done [#allocation6], 512
    $region21: #{tpu_custom_call.1} parent=1 // pred_fallthru
      _
    %v43 = vld [vmem:[#allocation2] sm:$0xff]
    %v44 = vld [vmem:[#allocation2 + $0x8] sm:$0xff]
    %v45 = vld [vmem:[#allocation2 + $0x10] sm:$0xff]
    %v46 = vld [vmem:[#allocation2 + $0x18] sm:$0xff]
    %v47 = vld [vmem:[#allocation2 + $0x20] sm:$0xff]
    %v48 = vld [vmem:[#allocation2 + $0x28] sm:$0xff]
    %v49 = vld [vmem:[#allocation2 + $0x30] sm:$0xff]
    %v50 = vld [vmem:[#allocation2 + $0x38] sm:$0xff]
    %v51 = vld [vmem:[#allocation5] sm:$0xff]
    %v52 = vld [vmem:[#allocation5 + $0x8] sm:$0xff]
    %v53 = vld [vmem:[#allocation5 + $0x10] sm:$0xff]
    %v54 = vld [vmem:[#allocation5 + $0x18] sm:$0xff]
    %v55 = vld [vmem:[%s2] sm:$0x1]
    %v57 = vlaneseq
    %v58 = vshrl.u32 %v57, 7
    %v59 = vsub.s32 0, %v58
    %v60 = vrot.slane %v55, %v59
    %vm62 = vcmask 261120
    %v64 = vsel %vm62, %v43, 0
    %v67 = vsel %vm62, %v44, 0
    %v70 = vsel %vm62, %v45, 0
    %v73 = vsel %vm62, %v46, 0
    %v76 = vsel %vm62, %v47, 0
    %v79 = vsel %vm62, %v48, 0
    %v82 = vsel %vm62, %v49, 0
    %v85 = vsel %vm62, %v50, 0
    %87 = vmatprep.subr.mxu0 0.0
    %88 = vmatpush1.msra.mxu0 %v51
    %89 = vmatprep.subr.mxu0 0.0
    %90 = vmatpush1.msra.mxu0 %v52
    %91 = vmatprep.subr.mxu0 0.0
    %92 = vmatpush1.msra.mxu0 %v53
    %93 = vmatprep.subr.mxu0 0.0
    %94 = vmatpush1.msra.mxu0 %v54
    %95 = vmatprep.subr.mxu0 0.0
    %96 = vmatpush1.msra.mxu0 0.0
    %97 = vmatprep.subr.mxu0 0.0
    %98 = vmatpush1.msra.mxu0 0.0
    %99 = vmatprep.subr.mxu0 0.0
    %100 = vmatpush1.msra.mxu0 0.0
    %101 = vmatprep.subr.mxu0 0.0
    %102 = vmatpush1.msra.mxu0 0.0
    %103 = vmatprep.subr.mxu0 0.0
    %104 = vmatpush1.msra.mxu0 0.0
    %105 = vmatprep.subr.mxu0 0.0
    %106 = vmatpush1.msra.mxu0 0.0
    %107 = vmatprep.subr.mxu0 0.0
    %108 = vmatpush1.msra.mxu0 0.0
    %109 = vmatprep.subr.mxu0 0.0
    %110 = vmatpush1.msra.mxu0 0.0
    %111 = vmatprep.subr.mxu0 0.0
    %112 = vmatpush1.msra.mxu0 0.0
    %113 = vmatprep.subr.mxu0 0.0
    %114 = vmatpush1.msra.mxu0 0.0
    %115 = vmatprep.subr.mxu0 0.0
    %116 = vmatpush1.msra.mxu0 0.0
    %117 = vmatprep.subr.mxu0 0.0
    %118 = vmatpush1.msra.mxu0 0.0
    %119 = vmatprep.subr.mxu0 0.0
    %120 = vmatpush1.msra.mxu0 0.0
    %121 = vmatprep.subr.mxu0 0.0
    %122 = vmatpush1.msra.mxu0 0.0
    %123 = vmatprep.subr.mxu0 0.0
    %124 = vmatpush1.msra.mxu0 0.0
    %125 = vmatprep.subr.mxu0 0.0
    %126 = vmatpush1.msra.mxu0 0.0
    %127 = vmatprep.subr.mxu0 0.0
    %128 = vmatpush1.msra.mxu0 0.0
    %129 = vmatprep.subr.mxu0 0.0
    %130 = vmatpush1.msra.mxu0 0.0
    %131 = vmatprep.subr.mxu0 0.0
    %132 = vmatpush1.msra.mxu0 0.0
    %133 = vmatprep.subr.mxu0 0.0
    %134 = vmatpush1.msra.mxu0 0.0
    %135 = vmatprep.subr.mxu0 0.0
    %136 = vmatpush1.msra.mxu0 0.0
    %137 = vmatprep.subr.mxu0 0.0
    %138 = vmatpush1.msra.mxu0 0.0
    %139 = vmatprep.subr.mxu0 0.0
    %140 = vmatpush1.msra.mxu0 0.0
    %141 = vmatprep.subr.mxu0 0.0
    %142 = vmatpush1.msra.mxu0 0.0
    %143 = vmatprep.subr.mxu0 0.0
    %144 = vmatpush1.msra.mxu0 0.0
    %145 = vmatprep.subr.mxu0 0.0
    %146 = vmatpush1.msra.mxu0 0.0
    %147 = vmatprep.subr.mxu0 0.0
    %148 = vmatpush1.msra.mxu0 0.0
    %149 = vmatprep.subr.mxu0 0.0
    %150 = vmatpush1.msra.mxu0 0.0
    %151 = vmatprep.mubr.f32.mxu0 0.0
    %152 = vmatmul.mubr.f32.gmra.mrb[0].mxu0 %v64
    %v153 = vpop.f32.mrb[0].mxu0
    %v154 = vadd.f32 %v60, %v153
    %v155 = vpop.f32.mrb[0].mxu0
    %156 = vmatprep.mubr.f32.mxu0 0.0
    %157 = vmatmul.mubr.f32.gmra.mrb[0].mxu0 %v67
    %v158 = vpop.f32.mrb[0].mxu0
    %v159 = vadd.f32 %v60, %v158
    %v160 = vpop.f32.mrb[0].mxu0
    %161 = vmatprep.mubr.f32.mxu0 0.0
    %162 = vmatmul.mubr.f32.gmra.mrb[0].mxu0 %v70
    %v163 = vpop.f32.mrb[0].mxu0
    %v164 = vadd.f32 %v60, %v163
    %v165 = vpop.f32.mrb[0].mxu0
    %166 = vmatprep.mubr.f32.mxu0 0.0
    %167 = vmatmul.mubr.f32.gmra.mrb[0].mxu0 %v73
    %v168 = vpop.f32.mrb[0].mxu0
    %v169 = vadd.f32 %v60, %v168
    %v170 = vpop.f32.mrb[0].mxu0
    %171 = vmatprep.mubr.f32.mxu0 0.0
    %172 = vmatmul.mubr.f32.gmra.mrb[0].mxu0 %v76
    %v173 = vpop.f32.mrb[0].mxu0
    %v174 = vadd.f32 %v60, %v173
    %v175 = vpop.f32.mrb[0].mxu0
    %176 = vmatprep.mubr.f32.mxu0 0.0
    %177 = vmatmul.mubr.f32.gmra.mrb[0].mxu0 %v79
    %v178 = vpop.f32.mrb[0].mxu0
    %v179 = vadd.f32 %v60, %v178
    %v180 = vpop.f32.mrb[0].mxu0
    %181 = vmatprep.mubr.f32.mxu0 0.0
    %182 = vmatmul.mubr.f32.gmra.mrb[0].mxu0 %v82
    %v183 = vpop.f32.mrb[0].mxu0
    %v184 = vadd.f32 %v60, %v183
    %v185 = vpop.f32.mrb[0].mxu0
    %186 = vmatprep.mubr.f32.mxu0 0.0
    %187 = vmatmul.mubr.f32.gmra.mrb[0].mxu0 %v85
    %v188 = vpop.f32.mrb[0].mxu0
    %v189 = vadd.f32 %v60, %v188
    %v190 = vpop.f32.mrb[0].mxu0
    %191 = vdwg.mxu0
    %v192 = vmul.f32 %v154, %v154
    %v193 = vmul.f32 %v159, %v159
    %v194 = vmul.f32 %v164, %v164
    %v195 = vmul.f32 %v169, %v169
    %v196 = vmul.f32 %v174, %v174
    %v197 = vmul.f32 %v179, %v179
    %v198 = vmul.f32 %v184, %v184
    %v199 = vmul.f32 %v189, %v189
    %200 = vadd.xlane.f32.xlu0 %v192
    %v201 = vpop.xlane.xlu0 %200
    %202 = vadd.xlane.f32.xlu0 %v193
    %v203 = vpop.xlane.xlu0 %202
    %204 = vadd.xlane.f32.xlu0 %v194
    %v205 = vpop.xlane.xlu0 %204
    %206 = vadd.xlane.f32.xlu0 %v195
    %v207 = vpop.xlane.xlu0 %206
    %208 = vadd.xlane.f32.xlu0 %v196
    %v209 = vpop.xlane.xlu0 %208
    %210 = vadd.xlane.f32.xlu0 %v197
    %v211 = vpop.xlane.xlu0 %210
    %212 = vadd.xlane.f32.xlu0 %v198
    %v213 = vpop.xlane.xlu0 %212
    %214 = vadd.xlane.f32.xlu0 %v199
    %v215 = vpop.xlane.xlu0 %214
    %v216 = vadd.f32 %v201, 1.0
    %v217 = vadd.f32 %v203, 1.0
    %v218 = vadd.f32 %v205, 1.0
    %v219 = vadd.f32 %v207, 1.0
    %v220 = vadd.f32 %v209, 1.0
    %v221 = vadd.f32 %v211, 1.0
    %v222 = vadd.f32 %v213, 1.0
    %v223 = vadd.f32 %v215, 1.0
    %v224 = vadd.f32 %v201, 1e-09
    %v225 = vadd.f32 %v203, 1e-09
    %v226 = vadd.f32 %v205, 1e-09
    %v227 = vadd.f32 %v207, 1e-09
    %v228 = vadd.f32 %v209, 1e-09
    %v229 = vadd.f32 %v211, 1e-09
    %v230 = vadd.f32 %v213, 1e-09
    %v231 = vadd.f32 %v215, 1e-09
    %v232 = vrsqrt.pop %v224
    %v233 = vmul.f32 %v224, %v232
    %vm234 = vcmp.eq.f32.partialorder %v224, inf
    %v235 = vsel %vm234, %v224, %v233
    %vm236 = vcmp.eq.f32.partialorder %v224, 0.0
    %v237 = vand.u32 %v224, 2147483648
    %v238 = vsel %vm236, %v237, %v235
    %v239 = vrsqrt.pop %v225
    %v240 = vmul.f32 %v225, %v239
    %vm241 = vcmp.eq.f32.partialorder %v225, inf
    %v242 = vsel %vm241, %v225, %v240
    %vm243 = vcmp.eq.f32.partialorder %v225, 0.0
    %v244 = vand.u32 %v225, 2147483648
    %v245 = vsel %vm243, %v244, %v242
    %v246 = vrsqrt.pop %v226
    %v247 = vmul.f32 %v226, %v246
    %vm248 = vcmp.eq.f32.partialorder %v226, inf
    %v249 = vsel %vm248, %v226, %v247
    %vm250 = vcmp.eq.f32.partialorder %v226, 0.0
    %v251 = vand.u32 %v226, 2147483648
    %v252 = vsel %vm250, %v251, %v249
    %v253 = vrsqrt.pop %v227
    %v254 = vmul.f32 %v227, %v253
    %vm255 = vcmp.eq.f32.partialorder %v227, inf
    %v256 = vsel %vm255, %v227, %v254
    %vm257 = vcmp.eq.f32.partialorder %v227, 0.0
    %v258 = vand.u32 %v227, 2147483648
    %v259 = vsel %vm257, %v258, %v256
    %v260 = vrsqrt.pop %v228
    %v261 = vmul.f32 %v228, %v260
    %vm262 = vcmp.eq.f32.partialorder %v228, inf
    %v263 = vsel %vm262, %v228, %v261
    %vm264 = vcmp.eq.f32.partialorder %v228, 0.0
    %v265 = vand.u32 %v228, 2147483648
    %v266 = vsel %vm264, %v265, %v263
    %v267 = vrsqrt.pop %v229
    %v268 = vmul.f32 %v229, %v267
    %vm269 = vcmp.eq.f32.partialorder %v229, inf
    %v270 = vsel %vm269, %v229, %v268
    %vm271 = vcmp.eq.f32.partialorder %v229, 0.0
    %v272 = vand.u32 %v229, 2147483648
    %v273 = vsel %vm271, %v272, %v270
    %v274 = vrsqrt.pop %v230
    %v275 = vmul.f32 %v230, %v274
    %vm276 = vcmp.eq.f32.partialorder %v230, inf
    %v277 = vsel %vm276, %v230, %v275
    %vm278 = vcmp.eq.f32.partialorder %v230, 0.0
    %v279 = vand.u32 %v230, 2147483648
    %v280 = vsel %vm278, %v279, %v277
    %v281 = vrsqrt.pop %v231
    %v282 = vmul.f32 %v231, %v281
    %vm283 = vcmp.eq.f32.partialorder %v231, inf
    %v284 = vsel %vm283, %v231, %v282
    %vm285 = vcmp.eq.f32.partialorder %v231, 0.0
    %v286 = vand.u32 %v231, 2147483648
    %v287 = vsel %vm285, %v286, %v284
    %v288 = vmul.f32 %v216, %v238
    %v289 = vmul.f32 %v217, %v245
    %v290 = vmul.f32 %v218, %v252
    %v291 = vmul.f32 %v219, %v259
    %v292 = vmul.f32 %v220, %v266
    %v293 = vmul.f32 %v221, %v273
    %v294 = vmul.f32 %v222, %v280
    %v295 = vmul.f32 %v223, %v287
    %v296 = vrcp.pop %v288
    %v297 = vmul.f32 %v201, %v296
    %v298 = vrcp.pop %v289
    %v299 = vmul.f32 %v203, %v298
    %v300 = vrcp.pop %v290
    %v301 = vmul.f32 %v205, %v300
    %v302 = vrcp.pop %v291
    %v303 = vmul.f32 %v207, %v302
    %v304 = vrcp.pop %v292
    %v305 = vmul.f32 %v209, %v304
    %v306 = vrcp.pop %v293
    %v307 = vmul.f32 %v211, %v306
    %v308 = vrcp.pop %v294
    %v309 = vmul.f32 %v213, %v308
    %v310 = vrcp.pop %v295
    %v311 = vmul.f32 %v215, %v310
    %v312 = vmul.f32 %v297, %v154
    %v313 = vmul.f32 %v299, %v159
    %v314 = vmul.f32 %v301, %v164
    %v315 = vmul.f32 %v303, %v169
    %v316 = vmul.f32 %v305, %v174
    %v317 = vmul.f32 %v307, %v179
    %v318 = vmul.f32 %v309, %v184
    %v319 = vmul.f32 %v311, %v189
    %vm320 = vcmask 64512
    %v321 = vsel %vm320, 1.0, 0.0
    %322 = vadd.xlane.f32.xlu0 %v321
    %v323 = vpop.xlane.xlu0 %322
    %v324 = vrcp.pop %v323
    %v325 = vmul.f32 1.0, %v324
    %v326 = vmul.f32 %v312, %v325
    %v327 = vmul.f32 %v313, %v325
    %v328 = vmul.f32 %v314, %v325
    %v329 = vmul.f32 %v315, %v325
    %v330 = vmul.f32 %v316, %v325
    %v331 = vmul.f32 %v317, %v325
    %v332 = vmul.f32 %v318, %v325
    %v333 = vmul.f32 %v319, %v325
    %v334 = vrot.slane %v326, 4
    %v335 = vadd.f32 %v326, %v334
    %v336 = vrot.slane %v335, 2
    %v337 = vadd.f32 %v335, %v336
    %v338 = vrot.slane %v337, 1
    %v339 = vadd.f32 %v337, %v338
    %v340 = vrot.slane %v327, 4
    %v341 = vadd.f32 %v327, %v340
    %v342 = vrot.slane %v341, 2
    %v343 = vadd.f32 %v341, %v342
    %v344 = vrot.slane %v343, 1
    %v345 = vadd.f32 %v343, %v344
    %v346 = vrot.slane %v328, 4
    %v347 = vadd.f32 %v328, %v346
    %v348 = vrot.slane %v347, 2
    %v349 = vadd.f32 %v347, %v348
    %v350 = vrot.slane %v349, 1
    %v351 = vadd.f32 %v349, %v350
    %v352 = vrot.slane %v329, 4
    %v353 = vadd.f32 %v329, %v352
    %v354 = vrot.slane %v353, 2
    %v355 = vadd.f32 %v353, %v354
    %v356 = vrot.slane %v355, 1
    %v357 = vadd.f32 %v355, %v356
    %v358 = vrot.slane %v330, 4
    %v359 = vadd.f32 %v330, %v358
    %v360 = vrot.slane %v359, 2
    %v361 = vadd.f32 %v359, %v360
    %v362 = vrot.slane %v361, 1
    %v363 = vadd.f32 %v361, %v362
    %v364 = vrot.slane %v331, 4
    %v365 = vadd.f32 %v331, %v364
    %v366 = vrot.slane %v365, 2
    %v367 = vadd.f32 %v365, %v366
    %v368 = vrot.slane %v367, 1
    %v369 = vadd.f32 %v367, %v368
    %v370 = vrot.slane %v332, 4
    %v371 = vadd.f32 %v332, %v370
    %v372 = vrot.slane %v371, 2
    %v373 = vadd.f32 %v371, %v372
    %v374 = vrot.slane %v373, 1
    %v375 = vadd.f32 %v373, %v374
    %v376 = vrot.slane %v333, 4
    %v377 = vadd.f32 %v333, %v376
    %v378 = vrot.slane %v377, 2
    %v379 = vadd.f32 %v377, %v378
    %v380 = vrot.slane %v379, 1
    %v381 = vadd.f32 %v379, %v380
    %v382 = vmul.f32 %v339, %v339
    %v383 = vmul.f32 %v345, %v345
    %v384 = vmul.f32 %v351, %v351
    %v385 = vmul.f32 %v357, %v357
    %v386 = vmul.f32 %v363, %v363
    %v387 = vmul.f32 %v369, %v369
    %v388 = vmul.f32 %v375, %v375
    %v389 = vmul.f32 %v381, %v381
    %vm398 = vcmask 1041409
    %v399 = vsel %vm398, %v383, %v382
    %vm400 = vcmask 1042434
    %v401 = vsel %vm400, %v384, %v399
    %vm402 = vcmask 1043459
    %v403 = vsel %vm402, %v385, %v401
    %vm404 = vcmask 1044484
    %v405 = vsel %vm404, %v386, %v403
    %vm406 = vcmask 1045509
    %v407 = vsel %vm406, %v387, %v405
    %vm408 = vcmask 1046534
    %v409 = vsel %vm408, %v388, %v407
    %vm410 = vcmask 1047559
    %v411 = vsel %vm410, %v389, %v409
    %413 = vadd.xlane.f32.xlu0 %v411
    %v414 = vpop.xlane.xlu0 %413
    %v415 = vadd.f32 %v414, 1.0
    %v416 = vadd.f32 %v414, 1e-09
    %v417 = vrsqrt.pop %v416
    %v418 = vmul.f32 %v416, %v417
    %vm419 = vcmp.eq.f32.partialorder %v416, inf
    %v420 = vsel %vm419, %v416, %v418
    %vm421 = vcmp.eq.f32.partialorder %v416, 0.0
    %v422 = vand.u32 %v416, 2147483648
    %v423 = vsel %vm421, %v422, %v420
    %v424 = vmul.f32 %v415, %v423
    %v425 = vrcp.pop %v424
    %v426 = vmul.f32 %v414, %v425
    %v435 = vsel %vm398, %v345, %v339
    %v436 = vsel %vm400, %v351, %v435
    %v437 = vsel %vm402, %v357, %v436
    %v438 = vsel %vm404, %v363, %v437
    %v439 = vsel %vm406, %v369, %v438
    %v440 = vsel %vm408, %v375, %v439
    %v441 = vsel %vm410, %v381, %v440
    %v443 = vmul.f32 %v426, %v441
    %v445 = vcombine.high %v443, %v443
    %v447 = vunpack.c.l.s4 1966171168
    %v448 = vunpack.c.0.s8 %v447
    %v449 = vlaneseq
    %v450 = vshrl.u32 %v449, 7
    %v451 = vsub.s32 %v448, %v450
    %v452 = vrot.slane %v443, %v451
    %v454 = vunpack.c.l.s4 1966171168
    %v455 = vunpack.c.0.s8 %v454
    %v456 = vlaneseq
    %v457 = vshrl.u32 %v456, 7
    %v458 = vsub.s32 %v455, %v457
    %v459 = vrot.slane %v445, %v458
    %v460 = vcombine.high %v452, %v452
    %v461 = vcombine.high %v459, %v459
    %v463 = vunpack.c.l.s4 1966171168
    %v464 = vunpack.c.0.s8 %v463
    %v465 = vlaneseq
    %v466 = vshrl.u32 %v465, 7
    %v467 = vsub.s32 %v464, %v466
    %v468 = vrot.slane %v452, %v467
    %v470 = vunpack.c.l.s4 1966171168
    %v471 = vunpack.c.0.s8 %v470
    %v472 = vlaneseq
    %v473 = vshrl.u32 %v472, 7
    %v474 = vsub.s32 %v471, %v473
    %v475 = vrot.slane %v459, %v474
    %v477 = vunpack.c.l.s4 1966171168
    %v478 = vunpack.c.0.s8 %v477
    %v479 = vlaneseq
    %v480 = vshrl.u32 %v479, 7
    %v481 = vsub.s32 %v478, %v480
    %v482 = vrot.slane %v460, %v481
    %v484 = vunpack.c.l.s4 1966171168
    %v485 = vunpack.c.0.s8 %v484
    %v486 = vlaneseq
    %v487 = vshrl.u32 %v486, 7
    %v488 = vsub.s32 %v485, %v487
    %v489 = vrot.slane %v461, %v488
    %v490 = vcombine.high %v468, %v468
    %v491 = vcombine.high %v475, %v475
    %v492 = vcombine.high %v482, %v482
    %v493 = vcombine.high %v489, %v489
    %v494 = vlaneseq
    %v495 = vshrl.u32 %v494, 7
    %v496 = vsub.s32 0, %v495
    %v497 = vrot.slane %v468, %v496
    %v498 = vlaneseq
    %v499 = vshrl.u32 %v498, 7
    %v500 = vsub.s32 0, %v499
    %v501 = vrot.slane %v482, %v500
    %v502 = vlaneseq
    %v503 = vshrl.u32 %v502, 7
    %v504 = vsub.s32 0, %v503
    %v505 = vrot.slane %v490, %v504
    %v506 = vlaneseq
    %v507 = vshrl.u32 %v506, 7
    %v508 = vsub.s32 0, %v507
    %v509 = vrot.slane %v492, %v508
    %v510 = vlaneseq
    %v511 = vshrl.u32 %v510, 7
    %v512 = vsub.s32 0, %v511
    %v513 = vrot.slane %v475, %v512
    %v514 = vlaneseq
    %v515 = vshrl.u32 %v514, 7
    %v516 = vsub.s32 0, %v515
    %v517 = vrot.slane %v489, %v516
    %v518 = vlaneseq
    %v519 = vshrl.u32 %v518, 7
    %v520 = vsub.s32 0, %v519
    %v521 = vrot.slane %v491, %v520
    %v522 = vlaneseq
    %v523 = vshrl.u32 %v522, 7
    %v524 = vsub.s32 0, %v523
    %v525 = vrot.slane %v493, %v524
    %v534 = vmul.f32 %v312, %v497
    %v535 = vmul.f32 %v313, %v501
    %v536 = vmul.f32 %v314, %v505
    %v537 = vmul.f32 %v315, %v509
    %v538 = vmul.f32 %v316, %v513
    %v539 = vmul.f32 %v317, %v517
    %v540 = vmul.f32 %v318, %v521
    %v541 = vmul.f32 %v319, %v525
    %542 = vadd.xlane.f32.xlu0 %v534
    %v543 = vpop.xlane.xlu0 %542
    %544 = vadd.xlane.f32.xlu0 %v535
    %v545 = vpop.xlane.xlu0 %544
    %546 = vadd.xlane.f32.xlu0 %v536
    %v547 = vpop.xlane.xlu0 %546
    %548 = vadd.xlane.f32.xlu0 %v537
    %v549 = vpop.xlane.xlu0 %548
    %550 = vadd.xlane.f32.xlu0 %v538
    %v551 = vpop.xlane.xlu0 %550
    %552 = vadd.xlane.f32.xlu0 %v539
    %v553 = vpop.xlane.xlu0 %552
    %554 = vadd.xlane.f32.xlu0 %v540
    %v555 = vpop.xlane.xlu0 %554
    %556 = vadd.xlane.f32.xlu0 %v541
    %v557 = vpop.xlane.xlu0 %556
    %v558 = vadd.f32 %v543, 0.0
    %v559 = vadd.f32 %v545, 0.0
    %v560 = vadd.f32 %v547, 0.0
    %v561 = vadd.f32 %v549, 0.0
    %v562 = vadd.f32 %v551, 0.0
    %v563 = vadd.f32 %v553, 0.0
    %v564 = vadd.f32 %v555, 0.0
    %v565 = vadd.f32 %v557, 0.0
    %v574 = vlaneseq
    %v575 = vand.u32 %v574, 127
    %v576 = vlaneseq
    %v577 = vshrl.u32 %v576, 7
    %v578 = vsub.s32 %v575, %v577
    %v579 = vrot.slane %v558, %v578
    %v580 = vlaneseq
    %v581 = vshrl.u32 %v580, 7
    %v582 = vsub.s32 %v575, %v581
    %v583 = vrot.slane %v559, %v582
    %v584 = vlaneseq
    %v585 = vshrl.u32 %v584, 7
    %v586 = vsub.s32 %v575, %v585
    %v587 = vrot.slane %v560, %v586
    %v588 = vlaneseq
    %v589 = vshrl.u32 %v588, 7
    %v590 = vsub.s32 %v575, %v589
    %v591 = vrot.slane %v561, %v590
    %v592 = vlaneseq
    %v593 = vshrl.u32 %v592, 7
    %v594 = vsub.s32 %v575, %v593
    %v595 = vrot.slane %v562, %v594
    %v596 = vlaneseq
    %v597 = vshrl.u32 %v596, 7
    %v598 = vsub.s32 %v575, %v597
    %v599 = vrot.slane %v563, %v598
    %v600 = vlaneseq
    %v601 = vshrl.u32 %v600, 7
    %v602 = vsub.s32 %v575, %v601
    %v603 = vrot.slane %v564, %v602
    %v604 = vlaneseq
    %v605 = vshrl.u32 %v604, 7
    %v606 = vsub.s32 %v575, %v605
    %v607 = vrot.slane %v565, %v606
    %v608 = vsel %vm398, %v583, %v579
    %v609 = vsel %vm400, %v587, %v608
    %v610 = vsel %vm402, %v591, %v609
    %v611 = vsel %vm404, %v595, %v610
    %v612 = vsel %vm406, %v599, %v611
    %v613 = vsel %vm408, %v603, %v612
    %v614 = vsel %vm410, %v607, %v613
    %v616 = vsel %vm320, %v614, -inf
    %617 = vmax.xlane.f32.xlu0 %v616
    %v618 = vpop.xlane.xlu0 %617
    %v620 = vlaneseq
    %v621 = vshrl.u32 %v620, 7
    %v622 = vsub.s32 0, %v621
    %v623 = vrot.slane %v618, %v622
    %v624 = vlaneseq
    %v625 = vshrl.u32 %v624, 7
    %v626 = vsub.s32 1, %v625
    %v627 = vrot.slane %v618, %v626
    %v628 = vlaneseq
    %v629 = vshrl.u32 %v628, 7
    %v630 = vsub.s32 2, %v629
    %v631 = vrot.slane %v618, %v630
    %v632 = vlaneseq
    %v633 = vshrl.u32 %v632, 7
    %v634 = vsub.s32 3, %v633
    %v635 = vrot.slane %v618, %v634
    %v636 = vlaneseq
    %v637 = vshrl.u32 %v636, 7
    %v638 = vsub.s32 4, %v637
    %v639 = vrot.slane %v618, %v638
    %v640 = vlaneseq
    %v641 = vshrl.u32 %v640, 7
    %v642 = vsub.s32 5, %v641
    %v643 = vrot.slane %v618, %v642
    %v644 = vlaneseq
    %v645 = vshrl.u32 %v644, 7
    %v646 = vsub.s32 6, %v645
    %v647 = vrot.slane %v618, %v646
    %v648 = vlaneseq
    %v649 = vshrl.u32 %v648, 7
    %v650 = vsub.s32 7, %v649
    %v651 = vrot.slane %v618, %v650
    %v660 = vsub.f32 %v558, %v623
    %v661 = vsub.f32 %v559, %v627
    %v662 = vsub.f32 %v560, %v631
    %v663 = vsub.f32 %v561, %v635
    %v664 = vsub.f32 %v562, %v639
    %v665 = vsub.f32 %v563, %v643
    %v666 = vsub.f32 %v564, %v647
    %v667 = vsub.f32 %v565, %v651
    %v668 = vmul.f32 %v660, 1.442695
    %v669 = vpow.pop %v668
    %v670 = vmul.f32 %v661, 1.442695
    %v671 = vpow.pop %v670
    %v672 = vmul.f32 %v662, 1.442695
    %v673 = vpow.pop %v672
    %v674 = vmul.f32 %v663, 1.442695
    %v675 = vpow.pop %v674
    %v676 = vmul.f32 %v664, 1.442695
    %v677 = vpow.pop %v676
    %v678 = vmul.f32 %v665, 1.442695
    %v679 = vpow.pop %v678
    %v680 = vmul.f32 %v666, 1.442695
    %v681 = vpow.pop %v680
    %v682 = vmul.f32 %v667, 1.442695
    %v683 = vpow.pop %v682
    %692 = vset.pattern.permute.xlu0 0
    %693 = vperm.xlu0 %692, %v669
    %v694 = vpop.permute.xlu0 %693
    %695 = vset.pattern.permute.xlu0 0
    %696 = vperm.xlu0 %695, %v671
    %v697 = vpop.permute.xlu0 %696
    %698 = vset.pattern.permute.xlu0 0
    %699 = vperm.xlu0 %698, %v673
    %v700 = vpop.permute.xlu0 %699
    %701 = vset.pattern.permute.xlu0 0
    %702 = vperm.xlu0 %701, %v675
    %v703 = vpop.permute.xlu0 %702
    %704 = vset.pattern.permute.xlu0 0
    %705 = vperm.xlu0 %704, %v677
    %v706 = vpop.permute.xlu0 %705
    %707 = vset.pattern.permute.xlu0 0
    %708 = vperm.xlu0 %707, %v679
    %v709 = vpop.permute.xlu0 %708
    %710 = vset.pattern.permute.xlu0 0
    %711 = vperm.xlu0 %710, %v681
    %v712 = vpop.permute.xlu0 %711
    %713 = vset.pattern.permute.xlu0 0
    %714 = vperm.xlu0 %713, %v683
    %v715 = vpop.permute.xlu0 %714
    %v716 = vlaneseq
    %v717 = vshrl.u32 %v716, 7
    %v718 = vsub.s32 %v575, %v717
    %v719 = vrot.slane %v694, %v718
    %v720 = vlaneseq
    %v721 = vshrl.u32 %v720, 7
    %v722 = vsub.s32 %v575, %v721
    %v723 = vrot.slane %v697, %v722
    %v724 = vlaneseq
    %v725 = vshrl.u32 %v724, 7
    %v726 = vsub.s32 %v575, %v725
    %v727 = vrot.slane %v700, %v726
    %v728 = vlaneseq
    %v729 = vshrl.u32 %v728, 7
    %v730 = vsub.s32 %v575, %v729
    %v731 = vrot.slane %v703, %v730
    %v732 = vlaneseq
    %v733 = vshrl.u32 %v732, 7
    %v734 = vsub.s32 %v575, %v733
    %v735 = vrot.slane %v706, %v734
    %v736 = vlaneseq
    %v737 = vshrl.u32 %v736, 7
    %v738 = vsub.s32 %v575, %v737
    %v739 = vrot.slane %v709, %v738
    %v740 = vlaneseq
    %v741 = vshrl.u32 %v740, 7
    %v742 = vsub.s32 %v575, %v741
    %v743 = vrot.slane %v712, %v742
    %v744 = vlaneseq
    %v745 = vshrl.u32 %v744, 7
    %v746 = vsub.s32 %v575, %v745
    %v747 = vrot.slane %v715, %v746
    %v748 = vsel %vm398, %v723, %v719
    %v749 = vsel %vm400, %v727, %v748
    %v750 = vsel %vm402, %v731, %v749
    %v751 = vsel %vm404, %v735, %v750
    %v752 = vsel %vm406, %v739, %v751
    %v753 = vsel %vm408, %v743, %v752
    %v754 = vsel %vm410, %v747, %v753
    %v756 = vsel %vm320, %v754, 0.0
    %757 = vadd.xlane.f32.xlu0 %v756
    %v758 = vpop.xlane.xlu0 %757
    %v760 = vlaneseq
    %v761 = vshrl.u32 %v760, 7
    %v762 = vsub.s32 0, %v761
    %v763 = vrot.slane %v758, %v762
    %v764 = vlaneseq
    %v765 = vshrl.u32 %v764, 7
    %v766 = vsub.s32 1, %v765
    %v767 = vrot.slane %v758, %v766
    %v768 = vlaneseq
    %v769 = vshrl.u32 %v768, 7
    %v770 = vsub.s32 2, %v769
    %v771 = vrot.slane %v758, %v770
    %v772 = vlaneseq
    %v773 = vshrl.u32 %v772, 7
    %v774 = vsub.s32 3, %v773
    %v775 = vrot.slane %v758, %v774
    %v776 = vlaneseq
    %v777 = vshrl.u32 %v776, 7
    %v778 = vsub.s32 4, %v777
    %v779 = vrot.slane %v758, %v778
    %v780 = vlaneseq
    %v781 = vshrl.u32 %v780, 7
    %v782 = vsub.s32 5, %v781
    %v783 = vrot.slane %v758, %v782
    %v784 = vlaneseq
    %v785 = vshrl.u32 %v784, 7
    %v786 = vsub.s32 6, %v785
    %v787 = vrot.slane %v758, %v786
    %v788 = vlaneseq
    %v789 = vshrl.u32 %v788, 7
    %v790 = vsub.s32 7, %v789
    %v791 = vrot.slane %v758, %v790
    %v800 = vrcp.pop %v763
    %v801 = vmul.f32 %v669, %v800
    %v802 = vrcp.pop %v767
    %v803 = vmul.f32 %v671, %v802
    %v804 = vrcp.pop %v771
    %v805 = vmul.f32 %v673, %v804
    %v806 = vrcp.pop %v775
    %v807 = vmul.f32 %v675, %v806
    %v808 = vrcp.pop %v779
    %v809 = vmul.f32 %v677, %v808
    %v810 = vrcp.pop %v783
    %v811 = vmul.f32 %v679, %v810
    %v812 = vrcp.pop %v787
    %v813 = vmul.f32 %v681, %v812
    %v814 = vrcp.pop %v791
    %v815 = vmul.f32 %v683, %v814
    %817 = vset.pattern.permute.xlu0 0
    %818 = vperm.xlu0 %817, %v801
    %v819 = vpop.permute.xlu0 %818
    %822 = vset.pattern.permute.xlu0 0
    %823 = vperm.xlu0 %822, %v803
    %v824 = vpop.permute.xlu0 %823
    %827 = vset.pattern.permute.xlu0 0
    %828 = vperm.xlu0 %827, %v805
    %v829 = vpop.permute.xlu0 %828
    %832 = vset.pattern.permute.xlu0 0
    %833 = vperm.xlu0 %832, %v807
    %v834 = vpop.permute.xlu0 %833
    %837 = vset.pattern.permute.xlu0 0
    %838 = vperm.xlu0 %837, %v809
    %v839 = vpop.permute.xlu0 %838
    %842 = vset.pattern.permute.xlu0 0
    %843 = vperm.xlu0 %842, %v811
    %v844 = vpop.permute.xlu0 %843
    %847 = vset.pattern.permute.xlu0 0
    %848 = vperm.xlu0 %847, %v813
    %v849 = vpop.permute.xlu0 %848
    %852 = vset.pattern.permute.xlu0 0
    %853 = vperm.xlu0 %852, %v815
    %v854 = vpop.permute.xlu0 %853
    %v856 = vmul.f32 %v312, %v819
    %v857 = vmul.f32 %v313, %v824
    %v858 = vmul.f32 %v314, %v829
    %v859 = vmul.f32 %v315, %v834
    %v860 = vmul.f32 %v316, %v839
    %v861 = vmul.f32 %v317, %v844
    %v862 = vmul.f32 %v318, %v849
    %v863 = vmul.f32 %v319, %v854
    %v864 = vrot.slane %v856, 4
    %v865 = vadd.f32 %v856, %v864
    %v866 = vrot.slane %v865, 2
    %v867 = vadd.f32 %v865, %v866
    %v868 = vrot.slane %v867, 1
    %v869 = vadd.f32 %v867, %v868
    %v870 = vrot.slane %v857, 4
    %v871 = vadd.f32 %v857, %v870
    %v872 = vrot.slane %v871, 2
    %v873 = vadd.f32 %v871, %v872
    %v874 = vrot.slane %v873, 1
    %v875 = vadd.f32 %v873, %v874
    %v876 = vrot.slane %v858, 4
    %v877 = vadd.f32 %v858, %v876
    %v878 = vrot.slane %v877, 2
    %v879 = vadd.f32 %v877, %v878
    %v880 = vrot.slane %v879, 1
    %v881 = vadd.f32 %v879, %v880
    %v882 = vrot.slane %v859, 4
    %v883 = vadd.f32 %v859, %v882
    %v884 = vrot.slane %v883, 2
    %v885 = vadd.f32 %v883, %v884
    %v886 = vrot.slane %v885, 1
    %v887 = vadd.f32 %v885, %v886
    %v888 = vrot.slane %v860, 4
    %v889 = vadd.f32 %v860, %v888
    %v890 = vrot.slane %v889, 2
    %v891 = vadd.f32 %v889, %v890
    %v892 = vrot.slane %v891, 1
    %v893 = vadd.f32 %v891, %v892
    %v894 = vrot.slane %v861, 4
    %v895 = vadd.f32 %v861, %v894
    %v896 = vrot.slane %v895, 2
    %v897 = vadd.f32 %v895, %v896
    %v898 = vrot.slane %v897, 1
    %v899 = vadd.f32 %v897, %v898
    %v900 = vrot.slane %v862, 4
    %v901 = vadd.f32 %v862, %v900
    %v902 = vrot.slane %v901, 2
    %v903 = vadd.f32 %v901, %v902
    %v904 = vrot.slane %v903, 1
    %v905 = vadd.f32 %v903, %v904
    %v906 = vrot.slane %v863, 4
    %v907 = vadd.f32 %v863, %v906
    %v908 = vrot.slane %v907, 2
    %v909 = vadd.f32 %v907, %v908
    %v910 = vrot.slane %v909, 1
    %v911 = vadd.f32 %v909, %v910
    %v912 = vmul.f32 %v869, %v869
    %v913 = vmul.f32 %v875, %v875
    %v914 = vmul.f32 %v881, %v881
    %v915 = vmul.f32 %v887, %v887
    %v916 = vmul.f32 %v893, %v893
    %v917 = vmul.f32 %v899, %v899
    %v918 = vmul.f32 %v905, %v905
    %v919 = vmul.f32 %v911, %v911
    %v928 = vsel %vm398, %v913, %v912
    %v929 = vsel %vm400, %v914, %v928
    %v930 = vsel %vm402, %v915, %v929
    %v931 = vsel %vm404, %v916, %v930
    %v932 = vsel %vm406, %v917, %v931
    %v933 = vsel %vm408, %v918, %v932
    %v934 = vsel %vm410, %v919, %v933
    %936 = vadd.xlane.f32.xlu0 %v934
    %v937 = vpop.xlane.xlu0 %936
    %v938 = vadd.f32 %v937, 1.0
    %v939 = vadd.f32 %v937, 1e-09
    %v940 = vrsqrt.pop %v939
    %v941 = vmul.f32 %v939, %v940
    %vm942 = vcmp.eq.f32.partialorder %v939, inf
    %v943 = vsel %vm942, %v939, %v941
    %vm944 = vcmp.eq.f32.partialorder %v939, 0.0
    %v945 = vand.u32 %v939, 2147483648
    %v946 = vsel %vm944, %v945, %v943
    %v947 = vmul.f32 %v938, %v946
    %v948 = vrcp.pop %v947
    %v949 = vmul.f32 %v937, %v948
    %v958 = vsel %vm398, %v875, %v869
    %v959 = vsel %vm400, %v881, %v958
    %v960 = vsel %vm402, %v887, %v959
    %v961 = vsel %vm404, %v893, %v960
    %v962 = vsel %vm406, %v899, %v961
    %v963 = vsel %vm408, %v905, %v962
    %v964 = vsel %vm410, %v911, %v963
    %v966 = vmul.f32 %v949, %v964
    %v968 = vcombine.high %v966, %v966
    %v970 = vunpack.c.l.s4 1966171168
    %v971 = vunpack.c.0.s8 %v970
    %v972 = vlaneseq
    %v973 = vshrl.u32 %v972, 7
    %v974 = vsub.s32 %v971, %v973
    %v975 = vrot.slane %v966, %v974
    %v977 = vunpack.c.l.s4 1966171168
    %v978 = vunpack.c.0.s8 %v977
    %v979 = vlaneseq
    %v980 = vshrl.u32 %v979, 7
    %v981 = vsub.s32 %v978, %v980
    %v982 = vrot.slane %v968, %v981
    %v983 = vcombine.high %v975, %v975
    %v984 = vcombine.high %v982, %v982
    %v986 = vunpack.c.l.s4 1966171168
    %v987 = vunpack.c.0.s8 %v986
    %v988 = vlaneseq
    %v989 = vshrl.u32 %v988, 7
    %v990 = vsub.s32 %v987, %v989
    %v991 = vrot.slane %v975, %v990
    %v993 = vunpack.c.l.s4 1966171168
    %v994 = vunpack.c.0.s8 %v993
    %v995 = vlaneseq
    %v996 = vshrl.u32 %v995, 7
    %v997 = vsub.s32 %v994, %v996
    %v998 = vrot.slane %v982, %v997
    %v1000 = vunpack.c.l.s4 1966171168
    %v1001 = vunpack.c.0.s8 %v1000
    %v1002 = vlaneseq
    %v1003 = vshrl.u32 %v1002, 7
    %v1004 = vsub.s32 %v1001, %v1003
    %v1005 = vrot.slane %v983, %v1004
    %v1007 = vunpack.c.l.s4 1966171168
    %v1008 = vunpack.c.0.s8 %v1007
    %v1009 = vlaneseq
    %v1010 = vshrl.u32 %v1009, 7
    %v1011 = vsub.s32 %v1008, %v1010
    %v1012 = vrot.slane %v984, %v1011
    %v1013 = vcombine.high %v991, %v991
    %v1014 = vcombine.high %v998, %v998
    %v1015 = vcombine.high %v1005, %v1005
    %v1016 = vcombine.high %v1012, %v1012
    %v1017 = vlaneseq
    %v1018 = vshrl.u32 %v1017, 7
    %v1019 = vsub.s32 0, %v1018
    %v1020 = vrot.slane %v991, %v1019
    %v1021 = vlaneseq
    %v1022 = vshrl.u32 %v1021, 7
    %v1023 = vsub.s32 0, %v1022
    %v1024 = vrot.slane %v1005, %v1023
    %v1025 = vlaneseq
    %v1026 = vshrl.u32 %v1025, 7
    %v1027 = vsub.s32 0, %v1026
    %v1028 = vrot.slane %v1013, %v1027
    %v1029 = vlaneseq
    %v1030 = vshrl.u32 %v1029, 7
    %v1031 = vsub.s32 0, %v1030
    %v1032 = vrot.slane %v1015, %v1031
    %v1033 = vlaneseq
    %v1034 = vshrl.u32 %v1033, 7
    %v1035 = vsub.s32 0, %v1034
    %v1036 = vrot.slane %v998, %v1035
    %v1037 = vlaneseq
    %v1038 = vshrl.u32 %v1037, 7
    %v1039 = vsub.s32 0, %v1038
    %v1040 = vrot.slane %v1012, %v1039
    %v1041 = vlaneseq
    %v1042 = vshrl.u32 %v1041, 7
    %v1043 = vsub.s32 0, %v1042
    %v1044 = vrot.slane %v1014, %v1043
    %v1045 = vlaneseq
    %v1046 = vshrl.u32 %v1045, 7
    %v1047 = vsub.s32 0, %v1046
    %v1048 = vrot.slane %v1016, %v1047
    %v1057 = vmul.f32 %v312, %v1020
    %v1058 = vmul.f32 %v313, %v1024
    %v1059 = vmul.f32 %v314, %v1028
    %v1060 = vmul.f32 %v315, %v1032
    %v1061 = vmul.f32 %v316, %v1036
    %v1062 = vmul.f32 %v317, %v1040
    %v1063 = vmul.f32 %v318, %v1044
    %v1064 = vmul.f32 %v319, %v1048
    %1065 = vadd.xlane.f32.xlu0 %v1057
    %v1066 = vpop.xlane.xlu0 %1065
    %1067 = vadd.xlane.f32.xlu0 %v1058
    %v1068 = vpop.xlane.xlu0 %1067
    %1069 = vadd.xlane.f32.xlu0 %v1059
    %v1070 = vpop.xlane.xlu0 %1069
    %1071 = vadd.xlane.f32.xlu0 %v1060
    %v1072 = vpop.xlane.xlu0 %1071
    %1073 = vadd.xlane.f32.xlu0 %v1061
    %v1074 = vpop.xlane.xlu0 %1073
    %1075 = vadd.xlane.f32.xlu0 %v1062
    %v1076 = vpop.xlane.xlu0 %1075
    %1077 = vadd.xlane.f32.xlu0 %v1063
    %v1078 = vpop.xlane.xlu0 %1077
    %1079 = vadd.xlane.f32.xlu0 %v1064
    %v1080 = vpop.xlane.xlu0 %1079
    %v1081 = vadd.f32 %v558, %v1066
    %v1082 = vadd.f32 %v559, %v1068
    %v1083 = vadd.f32 %v560, %v1070
    %v1084 = vadd.f32 %v561, %v1072
    %v1085 = vadd.f32 %v562, %v1074
    %v1086 = vadd.f32 %v563, %v1076
    %v1087 = vadd.f32 %v564, %v1078
    %v1088 = vadd.f32 %v565, %v1080
    %v1097 = vlaneseq
    %v1098 = vshrl.u32 %v1097, 7
    %v1099 = vsub.s32 %v575, %v1098
    %v1100 = vrot.slane %v1081, %v1099
    %v1101 = vlaneseq
    %v1102 = vshrl.u32 %v1101, 7
    %v1103 = vsub.s32 %v575, %v1102
    %v1104 = vrot.slane %v1082, %v1103
    %v1105 = vlaneseq
    %v1106 = vshrl.u32 %v1105, 7
    %v1107 = vsub.s32 %v575, %v1106
    %v1108 = vrot.slane %v1083, %v1107
    %v1109 = vlaneseq
    %v1110 = vshrl.u32 %v1109, 7
    %v1111 = vsub.s32 %v575, %v1110
    %v1112 = vrot.slane %v1084, %v1111
    %v1113 = vlaneseq
    %v1114 = vshrl.u32 %v1113, 7
    %v1115 = vsub.s32 %v575, %v1114
    %v1116 = vrot.slane %v1085, %v1115
    %v1117 = vlaneseq
    %v1118 = vshrl.u32 %v1117, 7
    %v1119 = vsub.s32 %v575, %v1118
    %v1120 = vrot.slane %v1086, %v1119
    %v1121 = vlaneseq
    %v1122 = vshrl.u32 %v1121, 7
    %v1123 = vsub.s32 %v575, %v1122
    %v1124 = vrot.slane %v1087, %v1123
    %v1125 = vlaneseq
    %v1126 = vshrl.u32 %v1125, 7
    %v1127 = vsub.s32 %v575, %v1126
    %v1128 = vrot.slane %v1088, %v1127
    %v1129 = vsel %vm398, %v1104, %v1100
    %v1130 = vsel %vm400, %v1108, %v1129
    %v1131 = vsel %vm402, %v1112, %v1130
    %v1132 = vsel %vm404, %v1116, %v1131
    %v1133 = vsel %vm406, %v1120, %v1132
    %v1134 = vsel %vm408, %v1124, %v1133
    %v1135 = vsel %vm410, %v1128, %v1134
    %v1137 = vsel %vm320, %v1135, -inf
    %1138 = vmax.xlane.f32.xlu0 %v1137
    %v1139 = vpop.xlane.xlu0 %1138
    %v1141 = vlaneseq
    %v1142 = vshrl.u32 %v1141, 7
    %v1143 = vsub.s32 0, %v1142
    %v1144 = vrot.slane %v1139, %v1143
    %v1145 = vlaneseq
    %v1146 = vshrl.u32 %v1145, 7
    %v1147 = vsub.s32 1, %v1146
    %v1148 = vrot.slane %v1139, %v1147
    %v1149 = vlaneseq
    %v1150 = vshrl.u32 %v1149, 7
    %v1151 = vsub.s32 2, %v1150
    %v1152 = vrot.slane %v1139, %v1151
    %v1153 = vlaneseq
    %v1154 = vshrl.u32 %v1153, 7
    %v1155 = vsub.s32 3, %v1154
    %v1156 = vrot.slane %v1139, %v1155
    %v1157 = vlaneseq
    %v1158 = vshrl.u32 %v1157, 7
    %v1159 = vsub.s32 4, %v1158
    %v1160 = vrot.slane %v1139, %v1159
    %v1161 = vlaneseq
    %v1162 = vshrl.u32 %v1161, 7
    %v1163 = vsub.s32 5, %v1162
    %v1164 = vrot.slane %v1139, %v1163
    %v1165 = vlaneseq
    %v1166 = vshrl.u32 %v1165, 7
    %v1167 = vsub.s32 6, %v1166
    %v1168 = vrot.slane %v1139, %v1167
    %v1169 = vlaneseq
    %v1170 = vshrl.u32 %v1169, 7
    %v1171 = vsub.s32 7, %v1170
    %v1172 = vrot.slane %v1139, %v1171
    %v1181 = vsub.f32 %v1081, %v1144
    %v1182 = vsub.f32 %v1082, %v1148
    %v1183 = vsub.f32 %v1083, %v1152
    %v1184 = vsub.f32 %v1084, %v1156
    %v1185 = vsub.f32 %v1085, %v1160
    %v1186 = vsub.f32 %v1086, %v1164
    %v1187 = vsub.f32 %v1087, %v1168
    %v1188 = vsub.f32 %v1088, %v1172
    %v1189 = vmul.f32 %v1181, 1.442695
    %v1190 = vpow.pop %v1189
    %v1191 = vmul.f32 %v1182, 1.442695
    %v1192 = vpow.pop %v1191
    %v1193 = vmul.f32 %v1183, 1.442695
    %v1194 = vpow.pop %v1193
    %v1195 = vmul.f32 %v1184, 1.442695
    %v1196 = vpow.pop %v1195
    %v1197 = vmul.f32 %v1185, 1.442695
    %v1198 = vpow.pop %v1197
    %v1199 = vmul.f32 %v1186, 1.442695
    %v1200 = vpow.pop %v1199
    %v1201 = vmul.f32 %v1187, 1.442695
    %v1202 = vpow.pop %v1201
    %v1203 = vmul.f32 %v1188, 1.442695
    %v1204 = vpow.pop %v1203
    %1213 = vset.pattern.permute.xlu0 0
    %1214 = vperm.xlu0 %1213, %v1190
    %v1215 = vpop.permute.xlu0 %1214
    %1216 = vset.pattern.permute.xlu0 0
    %1217 = vperm.xlu0 %1216, %v1192
    %v1218 = vpop.permute.xlu0 %1217
    %1219 = vset.pattern.permute.xlu0 0
    %1220 = vperm.xlu0 %1219, %v1194
    %v1221 = vpop.permute.xlu0 %1220
    %1222 = vset.pattern.permute.xlu0 0
    %1223 = vperm.xlu0 %1222, %v1196
    %v1224 = vpop.permute.xlu0 %1223
    %1225 = vset.pattern.permute.xlu0 0
    %1226 = vperm.xlu0 %1225, %v1198
    %v1227 = vpop.permute.xlu0 %1226
    %1228 = vset.pattern.permute.xlu0 0
    %1229 = vperm.xlu0 %1228, %v1200
    %v1230 = vpop.permute.xlu0 %1229
    %1231 = vset.pattern.permute.xlu0 0
    %1232 = vperm.xlu0 %1231, %v1202
    %v1233 = vpop.permute.xlu0 %1232
    %1234 = vset.pattern.permute.xlu0 0
    %1235 = vperm.xlu0 %1234, %v1204
    %v1236 = vpop.permute.xlu0 %1235
    %v1237 = vlaneseq
    %v1238 = vshrl.u32 %v1237, 7
    %v1239 = vsub.s32 %v575, %v1238
    %v1240 = vrot.slane %v1215, %v1239
    %v1241 = vlaneseq
    %v1242 = vshrl.u32 %v1241, 7
    %v1243 = vsub.s32 %v575, %v1242
    %v1244 = vrot.slane %v1218, %v1243
    %v1245 = vlaneseq
    %v1246 = vshrl.u32 %v1245, 7
    %v1247 = vsub.s32 %v575, %v1246
    %v1248 = vrot.slane %v1221, %v1247
    %v1249 = vlaneseq
    %v1250 = vshrl.u32 %v1249, 7
    %v1251 = vsub.s32 %v575, %v1250
    %v1252 = vrot.slane %v1224, %v1251
    %v1253 = vlaneseq
    %v1254 = vshrl.u32 %v1253, 7
    %v1255 = vsub.s32 %v575, %v1254
    %v1256 = vrot.slane %v1227, %v1255
    %v1257 = vlaneseq
    %v1258 = vshrl.u32 %v1257, 7
    %v1259 = vsub.s32 %v575, %v1258
    %v1260 = vrot.slane %v1230, %v1259
    %v1261 = vlaneseq
    %v1262 = vshrl.u32 %v1261, 7
    %v1263 = vsub.s32 %v575, %v1262
    %v1264 = vrot.slane %v1233, %v1263
    %v1265 = vlaneseq
    %v1266 = vshrl.u32 %v1265, 7
    %v1267 = vsub.s32 %v575, %v1266
    %v1268 = vrot.slane %v1236, %v1267
    %v1269 = vsel %vm398, %v1244, %v1240
    %v1270 = vsel %vm400, %v1248, %v1269
    %v1271 = vsel %vm402, %v1252, %v1270
    %v1272 = vsel %vm404, %v1256, %v1271
    %v1273 = vsel %vm406, %v1260, %v1272
    %v1274 = vsel %vm408, %v1264, %v1273
    %v1275 = vsel %vm410, %v1268, %v1274
    %v1277 = vsel %vm320, %v1275, 0.0
    %1278 = vadd.xlane.f32.xlu0 %v1277
    %v1279 = vpop.xlane.xlu0 %1278
    %v1281 = vlaneseq
    %v1282 = vshrl.u32 %v1281, 7
    %v1283 = vsub.s32 0, %v1282
    %v1284 = vrot.slane %v1279, %v1283
    %v1285 = vlaneseq
    %v1286 = vshrl.u32 %v1285, 7
    %v1287 = vsub.s32 1, %v1286
    %v1288 = vrot.slane %v1279, %v1287
    %v1289 = vlaneseq
    %v1290 = vshrl.u32 %v1289, 7
    %v1291 = vsub.s32 2, %v1290
    %v1292 = vrot.slane %v1279, %v1291
    %v1293 = vlaneseq
    %v1294 = vshrl.u32 %v1293, 7
    %v1295 = vsub.s32 3, %v1294
    %v1296 = vrot.slane %v1279, %v1295
    %v1297 = vlaneseq
    %v1298 = vshrl.u32 %v1297, 7
    %v1299 = vsub.s32 4, %v1298
    %v1300 = vrot.slane %v1279, %v1299
    %v1301 = vlaneseq
    %v1302 = vshrl.u32 %v1301, 7
    %v1303 = vsub.s32 5, %v1302
    %v1304 = vrot.slane %v1279, %v1303
    %v1305 = vlaneseq
    %v1306 = vshrl.u32 %v1305, 7
    %v1307 = vsub.s32 6, %v1306
    %v1308 = vrot.slane %v1279, %v1307
    %v1309 = vlaneseq
    %v1310 = vshrl.u32 %v1309, 7
    %v1311 = vsub.s32 7, %v1310
    %v1312 = vrot.slane %v1279, %v1311
    %v1321 = vrcp.pop %v1284
    %v1322 = vmul.f32 %v1190, %v1321
    %v1323 = vrcp.pop %v1288
    %v1324 = vmul.f32 %v1192, %v1323
    %v1325 = vrcp.pop %v1292
    %v1326 = vmul.f32 %v1194, %v1325
    %v1327 = vrcp.pop %v1296
    %v1328 = vmul.f32 %v1196, %v1327
    %v1329 = vrcp.pop %v1300
    %v1330 = vmul.f32 %v1198, %v1329
    %v1331 = vrcp.pop %v1304
    %v1332 = vmul.f32 %v1200, %v1331
    %v1333 = vrcp.pop %v1308
    %v1334 = vmul.f32 %v1202, %v1333
    %v1335 = vrcp.pop %v1312
    %v1336 = vmul.f32 %v1204, %v1335
    %1338 = vset.pattern.permute.xlu0 0
    %1339 = vperm.xlu0 %1338, %v1322
    %v1340 = vpop.permute.xlu0 %1339
    %1343 = vset.pattern.permute.xlu0 0
    %1344 = vperm.xlu0 %1343, %v1324
    %v1345 = vpop.permute.xlu0 %1344
    %1348 = vset.pattern.permute.xlu0 0
    %1349 = vperm.xlu0 %1348, %v1326
    %v1350 = vpop.permute.xlu0 %1349
    %1353 = vset.pattern.permute.xlu0 0
    %1354 = vperm.xlu0 %1353, %v1328
    %v1355 = vpop.permute.xlu0 %1354
    %1358 = vset.pattern.permute.xlu0 0
    %1359 = vperm.xlu0 %1358, %v1330
    %v1360 = vpop.permute.xlu0 %1359
    %1363 = vset.pattern.permute.xlu0 0
    %1364 = vperm.xlu0 %1363, %v1332
    %v1365 = vpop.permute.xlu0 %1364
    %1368 = vset.pattern.permute.xlu0 0
    %1369 = vperm.xlu0 %1368, %v1334
    %v1370 = vpop.permute.xlu0 %1369
    %1373 = vset.pattern.permute.xlu0 0
    %1374 = vperm.xlu0 %1373, %v1336
    %v1375 = vpop.permute.xlu0 %1374
    %v1377 = vmul.f32 %v312, %v1340
    %v1378 = vmul.f32 %v313, %v1345
    %v1379 = vmul.f32 %v314, %v1350
    %v1380 = vmul.f32 %v315, %v1355
    %v1381 = vmul.f32 %v316, %v1360
    %v1382 = vmul.f32 %v317, %v1365
    %v1383 = vmul.f32 %v318, %v1370
    %v1384 = vmul.f32 %v319, %v1375
    %v1385 = vrot.slane %v1377, 4
    %v1386 = vadd.f32 %v1377, %v1385
    %v1387 = vrot.slane %v1386, 2
    %v1388 = vadd.f32 %v1386, %v1387
    %v1389 = vrot.slane %v1388, 1
    %v1390 = vadd.f32 %v1388, %v1389
    %v1391 = vrot.slane %v1378, 4
    %v1392 = vadd.f32 %v1378, %v1391
    %v1393 = vrot.slane %v1392, 2
    %v1394 = vadd.f32 %v1392, %v1393
    %v1395 = vrot.slane %v1394, 1
    %v1396 = vadd.f32 %v1394, %v1395
    %v1397 = vrot.slane %v1379, 4
    %v1398 = vadd.f32 %v1379, %v1397
    %v1399 = vrot.slane %v1398, 2
    %v1400 = vadd.f32 %v1398, %v1399
    %v1401 = vrot.slane %v1400, 1
    %v1402 = vadd.f32 %v1400, %v1401
    %v1403 = vrot.slane %v1380, 4
    %v1404 = vadd.f32 %v1380, %v1403
    %v1405 = vrot.slane %v1404, 2
    %v1406 = vadd.f32 %v1404, %v1405
    %v1407 = vrot.slane %v1406, 1
    %v1408 = vadd.f32 %v1406, %v1407
    %v1409 = vrot.slane %v1381, 4
    %v1410 = vadd.f32 %v1381, %v1409
    %v1411 = vrot.slane %v1410, 2
    %v1412 = vadd.f32 %v1410, %v1411
    %v1413 = vrot.slane %v1412, 1
    %v1414 = vadd.f32 %v1412, %v1413
    %v1415 = vrot.slane %v1382, 4
    %v1416 = vadd.f32 %v1382, %v1415
    %v1417 = vrot.slane %v1416, 2
    %v1418 = vadd.f32 %v1416, %v1417
    %v1419 = vrot.slane %v1418, 1
    %v1420 = vadd.f32 %v1418, %v1419
    %v1421 = vrot.slane %v1383, 4
    %v1422 = vadd.f32 %v1383, %v1421
    %v1423 = vrot.slane %v1422, 2
    %v1424 = vadd.f32 %v1422, %v1423
    %v1425 = vrot.slane %v1424, 1
    %v1426 = vadd.f32 %v1424, %v1425
    %v1427 = vrot.slane %v1384, 4
    %v1428 = vadd.f32 %v1384, %v1427
    %v1429 = vrot.slane %v1428, 2
    %v1430 = vadd.f32 %v1428, %v1429
    %v1431 = vrot.slane %v1430, 1
    %v1432 = vadd.f32 %v1430, %v1431
    %v1433 = vmul.f32 %v1390, %v1390
    %v1434 = vmul.f32 %v1396, %v1396
    %v1435 = vmul.f32 %v1402, %v1402
    %v1436 = vmul.f32 %v1408, %v1408
    %v1437 = vmul.f32 %v1414, %v1414
    %v1438 = vmul.f32 %v1420, %v1420
    %v1439 = vmul.f32 %v1426, %v1426
    %v1440 = vmul.f32 %v1432, %v1432
    %v1449 = vsel %vm398, %v1434, %v1433
    %v1450 = vsel %vm400, %v1435, %v1449
    %v1451 = vsel %vm402, %v1436, %v1450
    %v1452 = vsel %vm404, %v1437, %v1451
    %v1453 = vsel %vm406, %v1438, %v1452
    %v1454 = vsel %vm408, %v1439, %v1453
    %v1455 = vsel %vm410, %v1440, %v1454
    %1457 = vadd.xlane.f32.xlu0 %v1455
    %v1458 = vpop.xlane.xlu0 %1457
    %v1459 = vadd.f32 %v1458, 1.0
    %v1460 = vadd.f32 %v1458, 1e-09
    %v1461 = vrsqrt.pop %v1460
    %v1462 = vmul.f32 %v1460, %v1461
    %vm1463 = vcmp.eq.f32.partialorder %v1460, inf
    %v1464 = vsel %vm1463, %v1460, %v1462
    %vm1465 = vcmp.eq.f32.partialorder %v1460, 0.0
    %v1466 = vand.u32 %v1460, 2147483648
    %v1467 = vsel %vm1465, %v1466, %v1464
    %v1468 = vmul.f32 %v1459, %v1467
    %v1469 = vrcp.pop %v1468
    %v1470 = vmul.f32 %v1458, %v1469
    %v1479 = vsel %vm398, %v1396, %v1390
    %v1480 = vsel %vm400, %v1402, %v1479
    %v1481 = vsel %vm402, %v1408, %v1480
    %v1482 = vsel %vm404, %v1414, %v1481
    %v1483 = vsel %vm406, %v1420, %v1482
    %v1484 = vsel %vm408, %v1426, %v1483
    %v1485 = vsel %vm410, %v1432, %v1484
    %v1487 = vmul.f32 %v1470, %v1485
    %1488 = vst.msk [vmem:[#allocation7] sm:$0xff] %vm62, %v1487
    // Predicated region
    $region22: #{tpu_custom_call.1} parent=1 // pred_check
      _
    $region23: #{tpu_custom_call.1} parent=1 // pred_check_branch
      %1490 = sbr.rel (0) target = $region25
    $region24: #{tpu_custom_call.1} parent=1 // pred_region
      %s1492 = ssub.s32 128, 128
      %1493 = vsyncadd [#allocation4], %s1492
      %s1495 = sshll.u32 [#allocation7], 4
      %s1496 = int_to_ptr.vmem [resolvable:$true] %s1495
      %1498 = dma.vmem_to_hbm [thread:$0]  %s1496, 128, %s3, [#allocation4]
    $region25: #{tpu_custom_call.1} parent=1 // pred_fallthru
      _
    // Predicated region
    $region26: #{tpu_custom_call.1} parent=1 // pred_check
      _
    $region27: #{tpu_custom_call.1} parent=1 // pred_check_branch
      %1500 = sbr.rel (0) target = $region29
    $region28: #{tpu_custom_call.1} parent=1 // pred_region
      %1501 = dma.done [#allocation4], 128
    $region29: #{tpu_custom_call.1} parent=1 // pred_fallthru
      _
    %1502 = vsyncpa [#allocation3], 1
    %1503 = vsyncpa [#allocation6], 1
    %1504 = vsyncpa [#allocation4], 1

</llo_original>
